<compile_context>
chip_gen: v5e
topology: v5e:2x2
jax: 0.10.0
libtpu: 0.0.40
codegen_flags: <defaults>
</compile_context>

<pallas_src>
import functools

import jax
import jax.numpy as jnp
import numpy as np
from jax.experimental import pallas as pl
from jax.experimental.pallas import tpu as pltpu

LANES = 128
SUBLANES = 8

# Chebyshev T_i(x) in the monomial basis: T_i(x) = sum_p _CHEB_TO_MONO[i, p] * x**p
_CHEB_TO_MONO = np.array(
    [[1.0, 0.0, 0.0, 0.0, 0.0],     # T0 = 1
     [0.0, 1.0, 0.0, 0.0, 0.0],     # T1 = x
     [-1.0, 0.0, 2.0, 0.0, 0.0],    # T2 = 2x^2 - 1
     [0.0, -3.0, 0.0, 4.0, 0.0],    # T3 = 4x^3 - 3x
     [1.0, 0.0, -8.0, 0.0, 8.0]],   # T4 = 8x^4 - 8x^2 + 1
    dtype=np.float32)


def chnn_kernel(d_ref, xy_ref, out_ref):
    # d_ref:  (25,) SMEM   -- folded coefficients D[p, j] at index 5*p + j
    #                         (bias already folded into D[0, 0]).
    # xy_ref: (2, br, 128) VMEM -- stacked lane-dense x / y slabs.
    # out_ref:(br, 128)    VMEM -- lane-dense output slab (unmasked stores).
    x = xy_ref[0]
    y = xy_ref[1]

    # Chebyshev T1..T4 in y via the recurrence (2*y hoisted, T0 == 1 implicit).
    two_y = y + y
    ty2 = two_y * y - 1.0
    ty3 = two_y * ty2 - y
    ty4 = two_y * ty3 - ty2

    def h(p):
        # h_p(y) = sum_j D[p, j] * T_j(y); T0 term folded into the scalar start.
        acc = d_ref[5 * p + 1] * y + d_ref[5 * p + 0]
        acc = acc + d_ref[5 * p + 2] * ty2
        acc = acc + d_ref[5 * p + 3] * ty3
        acc = acc + d_ref[5 * p + 4] * ty4
        return acc

    # Horner in x: out = (((h4*x + h3)*x + h2)*x + h1)*x + h0.
    # Each h_p is produced right before it is consumed -> small live set.
    out = h(4)
    for p in (3, 2, 1, 0):
        out = out * x + h(p)
    out_ref[...] = out


def _round_up(v, m):
    return ((v + m - 1) // m) * m


@functools.partial(jax.jit, static_argnames=("block_rows",))
def chnn_forward(input_data, weight, bias, *, block_rows=1024):
    """input_data: (N, 2) f32; weight: (25,) f32; bias: (1,) f32 -> (N, 1) f32."""
    N = input_data.shape[0]
    rows = pl.cdiv(N, LANES)  # sublane rows after packing N onto 128 lanes

    # Tile selection: one big block by default (grid is a serial loop on
    # v5e/v6e).  Only split the grid when every block keeps >= 512 rows
    # (>=256 KiB/slab), so the "parallel" axis pays off on v7x's 2 TCs.
    MIN_ROWS_PER_BLOCK = 512
    br = min(block_rows, _round_up(rows, SUBLANES))
    if rows >= 2 * MIN_ROWS_PER_BLOCK:
        br = min(br, max(MIN_ROWS_PER_BLOCK,
                         _round_up(pl.cdiv(rows, 2), SUBLANES)))
    br = max(SUBLANES, _round_up(br, SUBLANES))

    grid_n = pl.cdiv(rows, br)
    rows_pad = grid_n * br
    n_pad = rows_pad * LANES

    # Fold Linear(25->1) weights + bias: D = M^T @ W  (x side -> monomial
    # basis, y side stays Chebyshev), bias into the constant term D[0, 0].
    M = jnp.asarray(_CHEB_TO_MONO)
    W = weight.reshape(5, 5).astype(jnp.float32)  # weight[5*i + j] == W[i, j]
    D = M.T @ W
    D = D.at[0, 0].add(bias[0])
    d_flat = D.reshape(25)

    # Single fused layout op: (N, 2) -> (2, rows_pad, 128) lane-dense slab.
    xy = input_data.astype(jnp.float32).T          # (2, N)
    pad = n_pad - N
    if pad:
        xy = jnp.pad(xy, ((0, 0), (0, pad)))
    xy = xy.reshape(2, rows_pad, LANES)

    out2 = pl.pallas_call(
        chnn_kernel,
        out_shape=jax.ShapeDtypeStruct((rows_pad, LANES), jnp.float32),
        grid=(grid_n,),
        in_specs=[
            pl.BlockSpec(memory_space=pltpu.MemorySpace.SMEM),   # D (25,)
            pl.BlockSpec((2, br, LANES), lambda i: (0, i, 0)),   # stacked x/y
        ],
        out_specs=pl.BlockSpec((br, LANES), lambda i: (i, 0)),
        compiler_params=pltpu.CompilerParams(
            dimension_semantics=("parallel",)),
    )(d_flat, xy)

    return out2.reshape(-1)[:N].reshape(N, 1)


def reference_forward(input_data, weight, bias):
    """Pure-JAX reference mirroring the PyTorch module exactly."""
    x = input_data[:, 0:1]
    y = input_data[:, 1:2]
    Tx = jnp.concatenate(
        [jnp.ones_like(x), x, 2 * x**2 - 1, 4 * x**3 - 3 * x,
         8 * x**4 - 8 * x**2 + 1], axis=1)                       # (N, 5)
    Ty = jnp.concatenate(
        [jnp.ones_like(y), y, 2 * y**2 - 1, 4 * y**3 - 3 * y,
         8 * y**4 - 8 * y**2 + 1], axis=1)                       # (N, 5)
    T = (Tx[:, :, None] * Ty[:, None, :]).reshape(-1, 25)        # (N, 25)
    return T @ weight.reshape(25, 1) + bias


if __name__ == "__main__":
    num_degree = 4  # (num_degree + 1)**2 = 25 input features to fc

    key = jax.random.PRNGKey(0)
    k_in, k_in2, k_w, k_b = jax.random.split(key, 4)

    # fc = nn.Linear(25, 1) with xavier_uniform weight init
    fan_in, fan_out = (num_degree + 1) ** 2, 1
    xavier_bound = float(np.sqrt(6.0 / (fan_in + fan_out)))
    weight = jax.random.uniform(
        k_w, (fan_in,), dtype=jnp.float32, minval=-xavier_bound,
        maxval=xavier_bound)
    bias_bound = float(1.0 / np.sqrt(fan_in))
    bias = jax.random.uniform(
        k_b, (1,), dtype=jnp.float32, minval=-bias_bound, maxval=bias_bound)

    # Case 1: small N (not a multiple of 128) -> single block, grid of 1.
    N1 = 10000
    inp1 = jax.random.uniform(
        k_in, (N1, 2), dtype=jnp.float32, minval=-1.0, maxval=1.0)
    out1 = jax.block_until_ready(chnn_forward(inp1, weight, bias))
    ref1 = jax.block_until_ready(reference_forward(inp1, weight, bias))

    # Case 2: larger N -> exercises the split-grid ("parallel") path + padding.
    N2 = 150000
    inp2 = jax.random.uniform(
        k_in2, (N2, 2), dtype=jnp.float32, minval=-1.0, maxval=1.0)
    out2 = jax.block_until_ready(chnn_forward(inp2, weight, bias))
    ref2 = jax.block_until_ready(reference_forward(inp2, weight, bias))

    # atol=2e-5: folding the x-side weights into monomial coefficients
    # reorders f32 arithmetic slightly vs. the reference (mathematically
    # identical; observed deviations are O(1e-6)).
    np.testing.assert_allclose(np.asarray(out1), np.asarray(ref1),
                               rtol=1e-5, atol=2e-5)
    np.testing.assert_allclose(np.asarray(out2), np.asarray(ref2),
                               rtol=1e-5, atol=2e-5)

    assert out1.shape == (N1, 1) and out1.dtype == jnp.float32
    assert out2.shape == (N2, 1) and out2.dtype == jnp.float32
    print("KERNEL_OK")
</pallas_src>

<mosaic_0001>
module attributes {stable_mosaic.version = 11 : i64} {
  func.func @chnn_kernel(%arg0: i32, %arg1: memref<25xf32, #tpu.memory_space<smem>>, %arg2: memref<2x80x128xf32, #tpu.memory_space<vmem>>, %arg3: memref<80x128xf32, #tpu.memory_space<vmem>>) attributes {dimension_semantics = [#tpu.dimension_semantics<parallel>], iteration_bounds = array<i64: 1>, scalar_prefetch = 0 : i64, scratch_operands = 0 : i64, tpu.core_type = #tpu.core_type<tc>, window_params = [{transform_indices = @transform_0, window_bounds = array<i64: 25>}, {transform_indices = @transform_1, window_bounds = array<i64: 2, 80, 128>}, {transform_indices = @transform_2, window_bounds = array<i64: 80, 128>}]} {
    %c0 = arith.constant 0 : index
    %c0_0 = arith.constant 0 : index
    %c0_1 = arith.constant 0 : index
    %0 = vector.load %arg2[%c0, %c0_0, %c0_1] : memref<2x80x128xf32, #tpu.memory_space<vmem>>, vector<1x80x128xf32>
    %1 = vector.shape_cast %0 : vector<1x80x128xf32> to vector<80x128xf32>
    %c1 = arith.constant 1 : index
    %c0_2 = arith.constant 0 : index
    %c0_3 = arith.constant 0 : index
    %2 = vector.load %arg2[%c1, %c0_2, %c0_3] : memref<2x80x128xf32, #tpu.memory_space<vmem>>, vector<1x80x128xf32>
    %3 = vector.shape_cast %2 : vector<1x80x128xf32> to vector<80x128xf32>
    %4 = arith.addf %3, %3 : vector<80x128xf32>
    %5 = arith.mulf %4, %3 : vector<80x128xf32>
    %cst = arith.constant 1.000000e+00 : f32
    %6 = vector.broadcast %cst : f32 to vector<80x128xf32>
    %7 = arith.subf %5, %6 : vector<80x128xf32>
    %8 = arith.mulf %4, %7 : vector<80x128xf32>
    %9 = arith.subf %8, %3 : vector<80x128xf32>
    %10 = arith.mulf %4, %9 : vector<80x128xf32>
    %11 = arith.subf %10, %7 : vector<80x128xf32>
    %c21 = arith.constant 21 : index
    %12 = memref.load %arg1[%c21] : memref<25xf32, #tpu.memory_space<smem>>
    %13 = vector.broadcast %12 : f32 to vector<80x128xf32>
    %14 = arith.mulf %13, %3 : vector<80x128xf32>
    %c20 = arith.constant 20 : index
    %15 = memref.load %arg1[%c20] : memref<25xf32, #tpu.memory_space<smem>>
    %16 = vector.broadcast %15 : f32 to vector<80x128xf32>
    %17 = arith.addf %14, %16 : vector<80x128xf32>
    %c22 = arith.constant 22 : index
    %18 = memref.load %arg1[%c22] : memref<25xf32, #tpu.memory_space<smem>>
    %19 = vector.broadcast %18 : f32 to vector<80x128xf32>
    %20 = arith.mulf %19, %7 : vector<80x128xf32>
    %21 = arith.addf %17, %20 : vector<80x128xf32>
    %c23 = arith.constant 23 : index
    %22 = memref.load %arg1[%c23] : memref<25xf32, #tpu.memory_space<smem>>
    %23 = vector.broadcast %22 : f32 to vector<80x128xf32>
    %24 = arith.mulf %23, %9 : vector<80x128xf32>
    %25 = arith.addf %21, %24 : vector<80x128xf32>
    %c24 = arith.constant 24 : index
    %26 = memref.load %arg1[%c24] : memref<25xf32, #tpu.memory_space<smem>>
    %27 = vector.broadcast %26 : f32 to vector<80x128xf32>
    %28 = arith.mulf %27, %11 : vector<80x128xf32>
    %29 = arith.addf %25, %28 : vector<80x128xf32>
    %30 = arith.mulf %29, %1 : vector<80x128xf32>
    %c16 = arith.constant 16 : index
    %31 = memref.load %arg1[%c16] : memref<25xf32, #tpu.memory_space<smem>>
    %32 = vector.broadcast %31 : f32 to vector<80x128xf32>
    %33 = arith.mulf %32, %3 : vector<80x128xf32>
    %c15 = arith.constant 15 : index
    %34 = memref.load %arg1[%c15] : memref<25xf32, #tpu.memory_space<smem>>
    %35 = vector.broadcast %34 : f32 to vector<80x128xf32>
    %36 = arith.addf %33, %35 : vector<80x128xf32>
    %c17 = arith.constant 17 : index
    %37 = memref.load %arg1[%c17] : memref<25xf32, #tpu.memory_space<smem>>
    %38 = vector.broadcast %37 : f32 to vector<80x128xf32>
    %39 = arith.mulf %38, %7 : vector<80x128xf32>
    %40 = arith.addf %36, %39 : vector<80x128xf32>
    %c18 = arith.constant 18 : index
    %41 = memref.load %arg1[%c18] : memref<25xf32, #tpu.memory_space<smem>>
    %42 = vector.broadcast %41 : f32 to vector<80x128xf32>
    %43 = arith.mulf %42, %9 : vector<80x128xf32>
    %44 = arith.addf %40, %43 : vector<80x128xf32>
    %c19 = arith.constant 19 : index
    %45 = memref.load %arg1[%c19] : memref<25xf32, #tpu.memory_space<smem>>
    %46 = vector.broadcast %45 : f32 to vector<80x128xf32>
    %47 = arith.mulf %46, %11 : vector<80x128xf32>
    %48 = arith.addf %44, %47 : vector<80x128xf32>
    %49 = arith.addf %30, %48 : vector<80x128xf32>
    %50 = arith.mulf %49, %1 : vector<80x128xf32>
    %c11 = arith.constant 11 : index
    %51 = memref.load %arg1[%c11] : memref<25xf32, #tpu.memory_space<smem>>
    %52 = vector.broadcast %51 : f32 to vector<80x128xf32>
    %53 = arith.mulf %52, %3 : vector<80x128xf32>
    %c10 = arith.constant 10 : index
    %54 = memref.load %arg1[%c10] : memref<25xf32, #tpu.memory_space<smem>>
    %55 = vector.broadcast %54 : f32 to vector<80x128xf32>
    %56 = arith.addf %53, %55 : vector<80x128xf32>
    %c12 = arith.constant 12 : index
    %57 = memref.load %arg1[%c12] : memref<25xf32, #tpu.memory_space<smem>>
    %58 = vector.broadcast %57 : f32 to vector<80x128xf32>
    %59 = arith.mulf %58, %7 : vector<80x128xf32>
    %60 = arith.addf %56, %59 : vector<80x128xf32>
    %c13 = arith.constant 13 : index
    %61 = memref.load %arg1[%c13] : memref<25xf32, #tpu.memory_space<smem>>
    %62 = vector.broadcast %61 : f32 to vector<80x128xf32>
    %63 = arith.mulf %62, %9 : vector<80x128xf32>
    %64 = arith.addf %60, %63 : vector<80x128xf32>
    %c14 = arith.constant 14 : index
    %65 = memref.load %arg1[%c14] : memref<25xf32, #tpu.memory_space<smem>>
    %66 = vector.broadcast %65 : f32 to vector<80x128xf32>
    %67 = arith.mulf %66, %11 : vector<80x128xf32>
    %68 = arith.addf %64, %67 : vector<80x128xf32>
    %69 = arith.addf %50, %68 : vector<80x128xf32>
    %70 = arith.mulf %69, %1 : vector<80x128xf32>
    %c6 = arith.constant 6 : index
    %71 = memref.load %arg1[%c6] : memref<25xf32, #tpu.memory_space<smem>>
    %72 = vector.broadcast %71 : f32 to vector<80x128xf32>
    %73 = arith.mulf %72, %3 : vector<80x128xf32>
    %c5 = arith.constant 5 : index
    %74 = memref.load %arg1[%c5] : memref<25xf32, #tpu.memory_space<smem>>
    %75 = vector.broadcast %74 : f32 to vector<80x128xf32>
    %76 = arith.addf %73, %75 : vector<80x128xf32>
    %c7 = arith.constant 7 : index
    %77 = memref.load %arg1[%c7] : memref<25xf32, #tpu.memory_space<smem>>
    %78 = vector.broadcast %77 : f32 to vector<80x128xf32>
    %79 = arith.mulf %78, %7 : vector<80x128xf32>
    %80 = arith.addf %76, %79 : vector<80x128xf32>
    %c8 = arith.constant 8 : index
    %81 = memref.load %arg1[%c8] : memref<25xf32, #tpu.memory_space<smem>>
    %82 = vector.broadcast %81 : f32 to vector<80x128xf32>
    %83 = arith.mulf %82, %9 : vector<80x128xf32>
    %84 = arith.addf %80, %83 : vector<80x128xf32>
    %c9 = arith.constant 9 : index
    %85 = memref.load %arg1[%c9] : memref<25xf32, #tpu.memory_space<smem>>
    %86 = vector.broadcast %85 : f32 to vector<80x128xf32>
    %87 = arith.mulf %86, %11 : vector<80x128xf32>
    %88 = arith.addf %84, %87 : vector<80x128xf32>
    %89 = arith.addf %70, %88 : vector<80x128xf32>
    %90 = arith.mulf %89, %1 : vector<80x128xf32>
    %c1_4 = arith.constant 1 : index
    %91 = memref.load %arg1[%c1_4] : memref<25xf32, #tpu.memory_space<smem>>
    %92 = vector.broadcast %91 : f32 to vector<80x128xf32>
    %93 = arith.mulf %92, %3 : vector<80x128xf32>
    %c0_5 = arith.constant 0 : index
    %94 = memref.load %arg1[%c0_5] : memref<25xf32, #tpu.memory_space<smem>>
    %95 = vector.broadcast %94 : f32 to vector<80x128xf32>
    %96 = arith.addf %93, %95 : vector<80x128xf32>
    %c2 = arith.constant 2 : index
    %97 = memref.load %arg1[%c2] : memref<25xf32, #tpu.memory_space<smem>>
    %98 = vector.broadcast %97 : f32 to vector<80x128xf32>
    %99 = arith.mulf %98, %7 : vector<80x128xf32>
    %100 = arith.addf %96, %99 : vector<80x128xf32>
    %c3 = arith.constant 3 : index
    %101 = memref.load %arg1[%c3] : memref<25xf32, #tpu.memory_space<smem>>
    %102 = vector.broadcast %101 : f32 to vector<80x128xf32>
    %103 = arith.mulf %102, %9 : vector<80x128xf32>
    %104 = arith.addf %100, %103 : vector<80x128xf32>
    %c4 = arith.constant 4 : index
    %105 = memref.load %arg1[%c4] : memref<25xf32, #tpu.memory_space<smem>>
    %106 = vector.broadcast %105 : f32 to vector<80x128xf32>
    %107 = arith.mulf %106, %11 : vector<80x128xf32>
    %108 = arith.addf %104, %107 : vector<80x128xf32>
    %109 = arith.addf %90, %108 : vector<80x128xf32>
    %c0_6 = arith.constant 0 : index
    %c0_7 = arith.constant 0 : index
    %110 = vector.load %arg3[%c0_6, %c0_7] : memref<80x128xf32, #tpu.memory_space<vmem>>, vector<80x128xf32>
    tpu.vector_store %arg3[%c0_6, %c0_7], %109 {strides = array<i32>} : memref<80x128xf32, #tpu.memory_space<vmem>>, vector<80x128xf32>,
    return
  }
  func.func @transform_0(%arg0: i32) -> i32 {
    %c0_i32 = arith.constant 0 : i32
    %c0_i32_0 = arith.constant 0 : i32
    return %c0_i32 : i32
  }
  func.func @transform_1(%arg0: i32) -> (i32, i32, i32) {
    %c0_i32 = arith.constant 0 : i32
    %c0_i32_0 = arith.constant 0 : i32
    %c0_i32_1 = arith.constant 0 : i32
    return %c0_i32, %arg0, %c0_i32_0 : i32, i32, i32
  }
  func.func @transform_2(%arg0: i32) -> (i32, i32) {
    %c0_i32 = arith.constant 0 : i32
    %c0_i32_0 = arith.constant 0 : i32
    return %arg0, %c0_i32 : i32, i32
  }
}

</mosaic_0001>

<llo_original>
// kernel: chnn_forward.1
$region0: #{chnn_forward.1}
  #allocation0 [shape = 'u32[]', space=smem, size = 0x4, offset = 0x4, fixed_abs, tag = 'smem constant byte address 0x4 - core index']
  #allocation1 [shape = 'u32[72,128]{1,0:T(1,128)}', space=vmem, size = 0x9000, scoped, tag = 'internal scratch']
  %s0 = inlined_call_operand.vmem [shape: f32[25], index: 0, kind: input, shape index: {}]
  %s1 = inlined_call_operand.vmem [shape: f32[2,80,128], index: 1, kind: input, shape index: {}]
  %s2 = inlined_call_operand.vmem [shape: f32[80,128], index: 2, kind: output, shape index: {}]
  %s3 = sld [smem:[#allocation0]]
  $region22: #{chnn_forward.1} parent=0
    _
  %s5 = ssub.s32 1, %s3
  %s6 = scalar_select 0, %s5, %s3
  $region1: #{chnn_forward.1} parent=0
    #allocation2 [shape = 'u8[512]{0}', space=smem, size = 0x200, scoped, tag = 'input window, operand 0, single buffered']
    #allocation3 [shape = 's32[1]{0}', space=sflag, size = 0x4, scoped, tag = 'scoped memory for chnn_forward.1']
    %7 = vsyncpa [#allocation3], 0
    // Predicated region
    $region2: #{chnn_forward.1} parent=1 // pred_check
      _
    $region3: #{chnn_forward.1} parent=1 // pred_check_branch
      %9 = sbr.rel (0) target = $region5
    $region4: #{chnn_forward.1} parent=1 // pred_region
      %11 = vsyncadd [#allocation3], 0
      %s13 = sshll.u32 %s0, 4
      %s14 = int_to_ptr.vmem [resolvable:$true] %s13
      %16 = dma.vmem_to_smem %s14, 16, [#allocation2], [#allocation3]
    $region5: #{chnn_forward.1} parent=1 // pred_fallthru
      _
    // Predicated region
    $region6: #{chnn_forward.1} parent=1 // pred_check
      _
    $region7: #{chnn_forward.1} parent=1 // pred_check_branch
      %18 = sbr.rel (0) target = $region9
    $region8: #{chnn_forward.1} parent=1 // pred_region
      _
    $region9: #{chnn_forward.1} parent=1 // pred_fallthru
      _
    // Predicated region
    $region10: #{chnn_forward.1} parent=1 // pred_check
      _
    $region11: #{chnn_forward.1} parent=1 // pred_check_branch
      %20 = sbr.rel (0) target = $region13
    $region12: #{chnn_forward.1} parent=1 // pred_region
      %22 = dma.done [#allocation3], 16
    $region13: #{chnn_forward.1} parent=1 // pred_fallthru
      _
    %23 = sfence
    %v24 = vld [vmem:[%s1] sm:$0xff]
    %v25 = vld [vmem:[%s1 + $0x8] sm:$0xff]
    %v26 = vld [vmem:[%s1 + $0x10] sm:$0xff]
    %v27 = vld [vmem:[%s1 + $0x18] sm:$0xff]
    %v28 = vld [vmem:[%s1 + $0x20] sm:$0xff]
    %v29 = vld [vmem:[%s1 + $0x28] sm:$0xff]
    %v30 = vld [vmem:[%s1 + $0x30] sm:$0xff]
    %v31 = vld [vmem:[%s1 + $0x38] sm:$0xff]
    %v32 = vld [vmem:[%s1 + $0x40] sm:$0xff]
    %v33 = vld [vmem:[%s1 + $0x48] sm:$0xff]
    %s34 = scalar_lea.vmem %s1, 80
    %v35 = vld [vmem:[%s34] sm:$0xff]
    %v36 = vld [vmem:[%s34 + $0x8] sm:$0xff]
    %v37 = vld [vmem:[%s34 + $0x10] sm:$0xff]
    %v38 = vld [vmem:[%s34 + $0x18] sm:$0xff]
    %v39 = vld [vmem:[%s34 + $0x20] sm:$0xff]
    %v40 = vld [vmem:[%s34 + $0x28] sm:$0xff]
    %v41 = vld [vmem:[%s34 + $0x30] sm:$0xff]
    %v42 = vld [vmem:[%s34 + $0x38] sm:$0xff]
    %v43 = vld [vmem:[%s34 + $0x40] sm:$0xff]
    %v44 = vld [vmem:[%s34 + $0x48] sm:$0xff]
    %v45 = vadd.f32 %v35, %v35
    %v46 = vadd.f32 %v36, %v36
    %v47 = vadd.f32 %v37, %v37
    %v48 = vadd.f32 %v38, %v38
    %v49 = vadd.f32 %v39, %v39
    %v50 = vadd.f32 %v40, %v40
    %v51 = vadd.f32 %v41, %v41
    %v52 = vadd.f32 %v42, %v42
    %v53 = vadd.f32 %v43, %v43
    %v54 = vadd.f32 %v44, %v44
    %v55 = vmul.f32 %v45, %v35
    %v56 = vmul.f32 %v46, %v36
    %v57 = vmul.f32 %v47, %v37
    %v58 = vmul.f32 %v48, %v38
    %v59 = vmul.f32 %v49, %v39
    %v60 = vmul.f32 %v50, %v40
    %v61 = vmul.f32 %v51, %v41
    %v62 = vmul.f32 %v52, %v42
    %v63 = vmul.f32 %v53, %v43
    %v64 = vmul.f32 %v54, %v44
    %v65 = vsub.f32 %v55, 1.0
    %v66 = vsub.f32 %v56, 1.0
    %v67 = vsub.f32 %v57, 1.0
    %v68 = vsub.f32 %v58, 1.0
    %v69 = vsub.f32 %v59, 1.0
    %v70 = vsub.f32 %v60, 1.0
    %v71 = vsub.f32 %v61, 1.0
    %v72 = vsub.f32 %v62, 1.0
    %v73 = vsub.f32 %v63, 1.0
    %v74 = vsub.f32 %v64, 1.0
    %v75 = vmul.f32 %v45, %v65
    %v76 = vmul.f32 %v46, %v66
    %v77 = vmul.f32 %v47, %v67
    %v78 = vmul.f32 %v48, %v68
    %v79 = vmul.f32 %v49, %v69
    %v80 = vmul.f32 %v50, %v70
    %v81 = vmul.f32 %v51, %v71
    %v82 = vmul.f32 %v52, %v72
    %v83 = vmul.f32 %v53, %v73
    %v84 = vmul.f32 %v54, %v74
    %v85 = vsub.f32 %v75, %v35
    %v86 = vsub.f32 %v76, %v36
    %v87 = vsub.f32 %v77, %v37
    %v88 = vsub.f32 %v78, %v38
    %v89 = vsub.f32 %v79, %v39
    %v90 = vsub.f32 %v80, %v40
    %v91 = vsub.f32 %v81, %v41
    %v92 = vsub.f32 %v82, %v42
    %v93 = vsub.f32 %v83, %v43
    %v94 = vsub.f32 %v84, %v44
    %v95 = vmul.f32 %v45, %v85
    %v96 = vmul.f32 %v46, %v86
    %v97 = vmul.f32 %v47, %v87
    %v98 = vmul.f32 %v48, %v88
    %v99 = vmul.f32 %v49, %v89
    %v100 = vmul.f32 %v50, %v90
    %v101 = vmul.f32 %v51, %v91
    %v102 = vmul.f32 %v52, %v92
    %v103 = vmul.f32 %v53, %v93
    %v104 = vmul.f32 %v54, %v94
    %v105 = vsub.f32 %v95, %v65
    %v106 = vsub.f32 %v96, %v66
    %v107 = vsub.f32 %v97, %v67
    %v108 = vsub.f32 %v98, %v68
    %v109 = vsub.f32 %v99, %v69
    %v110 = vsub.f32 %v100, %v70
    %v111 = vsub.f32 %v101, %v71
    %v112 = vsub.f32 %v102, %v72
    %v113 = vsub.f32 %v103, %v73
    %v114 = vsub.f32 %v104, %v74
    %s115 = sld [smem:[#allocation2 + $0x15]]
    %v116 = vstv %s115
    %v117 = vmul.f32 %v116, %v35
    %v118 = vmul.f32 %v116, %v36
    %v119 = vmul.f32 %v116, %v37
    %v120 = vmul.f32 %v116, %v38
    %v121 = vmul.f32 %v116, %v39
    %v122 = vmul.f32 %v116, %v40
    %v123 = vmul.f32 %v116, %v41
    %v124 = vmul.f32 %v116, %v42
    %v125 = vmul.f32 %v116, %v43
    %v126 = vmul.f32 %v116, %v44
    %s127 = sld [smem:[#allocation2 + $0x14]]
    %v128 = vstv %s127
    %v129 = vadd.f32 %v117, %v128
    %v130 = vadd.f32 %v118, %v128
    %v131 = vadd.f32 %v119, %v128
    %v132 = vadd.f32 %v120, %v128
    %v133 = vadd.f32 %v121, %v128
    %v134 = vadd.f32 %v122, %v128
    %v135 = vadd.f32 %v123, %v128
    %v136 = vadd.f32 %v124, %v128
    %v137 = vadd.f32 %v125, %v128
    %v138 = vadd.f32 %v126, %v128
    %s139 = sld [smem:[#allocation2 + $0x16]]
    %v140 = vstv %s139
    %v141 = vmul.f32 %v140, %v65
    %v142 = vmul.f32 %v140, %v66
    %v143 = vmul.f32 %v140, %v67
    %v144 = vmul.f32 %v140, %v68
    %v145 = vmul.f32 %v140, %v69
    %v146 = vmul.f32 %v140, %v70
    %v147 = vmul.f32 %v140, %v71
    %v148 = vmul.f32 %v140, %v72
    %v149 = vmul.f32 %v140, %v73
    %v150 = vmul.f32 %v140, %v74
    %v151 = vadd.f32 %v129, %v141
    %v152 = vadd.f32 %v130, %v142
    %v153 = vadd.f32 %v131, %v143
    %v154 = vadd.f32 %v132, %v144
    %v155 = vadd.f32 %v133, %v145
    %v156 = vadd.f32 %v134, %v146
    %v157 = vadd.f32 %v135, %v147
    %v158 = vadd.f32 %v136, %v148
    %v159 = vadd.f32 %v137, %v149
    %v160 = vadd.f32 %v138, %v150
    %s161 = sld [smem:[#allocation2 + $0x17]]
    %v162 = vstv %s161
    %v163 = vmul.f32 %v162, %v85
    %v164 = vmul.f32 %v162, %v86
    %v165 = vmul.f32 %v162, %v87
    %v166 = vmul.f32 %v162, %v88
    %v167 = vmul.f32 %v162, %v89
    %v168 = vmul.f32 %v162, %v90
    %v169 = vmul.f32 %v162, %v91
    %v170 = vmul.f32 %v162, %v92
    %v171 = vmul.f32 %v162, %v93
    %v172 = vmul.f32 %v162, %v94
    %v173 = vadd.f32 %v151, %v163
    %v174 = vadd.f32 %v152, %v164
    %v175 = vadd.f32 %v153, %v165
    %v176 = vadd.f32 %v154, %v166
    %v177 = vadd.f32 %v155, %v167
    %v178 = vadd.f32 %v156, %v168
    %v179 = vadd.f32 %v157, %v169
    %v180 = vadd.f32 %v158, %v170
    %v181 = vadd.f32 %v159, %v171
    %v182 = vadd.f32 %v160, %v172
    %s183 = sld [smem:[#allocation2 + $0x18]]
    %v184 = vstv %s183
    %v185 = vmul.f32 %v184, %v105
    %v186 = vmul.f32 %v184, %v106
    %v187 = vmul.f32 %v184, %v107
    %v188 = vmul.f32 %v184, %v108
    %v189 = vmul.f32 %v184, %v109
    %v190 = vmul.f32 %v184, %v110
    %v191 = vmul.f32 %v184, %v111
    %v192 = vmul.f32 %v184, %v112
    %v193 = vmul.f32 %v184, %v113
    %v194 = vmul.f32 %v184, %v114
    %v195 = vadd.f32 %v173, %v185
    %v196 = vadd.f32 %v174, %v186
    %v197 = vadd.f32 %v175, %v187
    %v198 = vadd.f32 %v176, %v188
    %v199 = vadd.f32 %v177, %v189
    %v200 = vadd.f32 %v178, %v190
    %v201 = vadd.f32 %v179, %v191
    %v202 = vadd.f32 %v180, %v192
    %v203 = vadd.f32 %v181, %v193
    %v204 = vadd.f32 %v182, %v194
    %v205 = vmul.f32 %v195, %v24
    %v206 = vmul.f32 %v196, %v25
    %v207 = vmul.f32 %v197, %v26
    %v208 = vmul.f32 %v198, %v27
    %v209 = vmul.f32 %v199, %v28
    %v210 = vmul.f32 %v200, %v29
    %v211 = vmul.f32 %v201, %v30
    %v212 = vmul.f32 %v202, %v31
    %v213 = vmul.f32 %v203, %v32
    %v214 = vmul.f32 %v204, %v33
    %s215 = sld [smem:[#allocation2 + $0x10]]
    %v216 = vstv %s215
    %v217 = vmul.f32 %v216, %v35
    %v218 = vmul.f32 %v216, %v36
    %v219 = vmul.f32 %v216, %v37
    %v220 = vmul.f32 %v216, %v38
    %v221 = vmul.f32 %v216, %v39
    %v222 = vmul.f32 %v216, %v40
    %v223 = vmul.f32 %v216, %v41
    %v224 = vmul.f32 %v216, %v42
    %v225 = vmul.f32 %v216, %v43
    %v226 = vmul.f32 %v216, %v44
    %s227 = sld [smem:[#allocation2 + $0xf]]
    %v228 = vstv %s227
    %v229 = vadd.f32 %v217, %v228
    %v230 = vadd.f32 %v218, %v228
    %v231 = vadd.f32 %v219, %v228
    %v232 = vadd.f32 %v220, %v228
    %v233 = vadd.f32 %v221, %v228
    %v234 = vadd.f32 %v222, %v228
    %v235 = vadd.f32 %v223, %v228
    %v236 = vadd.f32 %v224, %v228
    %v237 = vadd.f32 %v225, %v228
    %v238 = vadd.f32 %v226, %v228
    %s239 = sld [smem:[#allocation2 + $0x11]]
    %v240 = vstv %s239
    %v241 = vmul.f32 %v240, %v65
    %v242 = vmul.f32 %v240, %v66
    %v243 = vmul.f32 %v240, %v67
    %v244 = vmul.f32 %v240, %v68
    %v245 = vmul.f32 %v240, %v69
    %v246 = vmul.f32 %v240, %v70
    %v247 = vmul.f32 %v240, %v71
    %v248 = vmul.f32 %v240, %v72
    %v249 = vmul.f32 %v240, %v73
    %v250 = vmul.f32 %v240, %v74
    %v251 = vadd.f32 %v229, %v241
    %v252 = vadd.f32 %v230, %v242
    %v253 = vadd.f32 %v231, %v243
    %v254 = vadd.f32 %v232, %v244
    %v255 = vadd.f32 %v233, %v245
    %v256 = vadd.f32 %v234, %v246
    %v257 = vadd.f32 %v235, %v247
    %v258 = vadd.f32 %v236, %v248
    %v259 = vadd.f32 %v237, %v249
    %v260 = vadd.f32 %v238, %v250
    %s261 = sld [smem:[#allocation2 + $0x12]]
    %v262 = vstv %s261
    %v263 = vmul.f32 %v262, %v85
    %v264 = vmul.f32 %v262, %v86
    %v265 = vmul.f32 %v262, %v87
    %v266 = vmul.f32 %v262, %v88
    %v267 = vmul.f32 %v262, %v89
    %v268 = vmul.f32 %v262, %v90
    %v269 = vmul.f32 %v262, %v91
    %v270 = vmul.f32 %v262, %v92
    %v271 = vmul.f32 %v262, %v93
    %v272 = vmul.f32 %v262, %v94
    %v273 = vadd.f32 %v251, %v263
    %v274 = vadd.f32 %v252, %v264
    %v275 = vadd.f32 %v253, %v265
    %v276 = vadd.f32 %v254, %v266
    %v277 = vadd.f32 %v255, %v267
    %v278 = vadd.f32 %v256, %v268
    %v279 = vadd.f32 %v257, %v269
    %v280 = vadd.f32 %v258, %v270
    %v281 = vadd.f32 %v259, %v271
    %v282 = vadd.f32 %v260, %v272
    %s283 = sld [smem:[#allocation2 + $0x13]]
    %v284 = vstv %s283
    %v285 = vmul.f32 %v284, %v105
    %v286 = vmul.f32 %v284, %v106
    %v287 = vmul.f32 %v284, %v107
    %v288 = vmul.f32 %v284, %v108
    %v289 = vmul.f32 %v284, %v109
    %v290 = vmul.f32 %v284, %v110
    %v291 = vmul.f32 %v284, %v111
    %v292 = vmul.f32 %v284, %v112
    %v293 = vmul.f32 %v284, %v113
    %v294 = vmul.f32 %v284, %v114
    %v295 = vadd.f32 %v273, %v285
    %v296 = vadd.f32 %v274, %v286
    %v297 = vadd.f32 %v275, %v287
    %v298 = vadd.f32 %v276, %v288
    %v299 = vadd.f32 %v277, %v289
    %v300 = vadd.f32 %v278, %v290
    %v301 = vadd.f32 %v279, %v291
    %v302 = vadd.f32 %v280, %v292
    %v303 = vadd.f32 %v281, %v293
    %v304 = vadd.f32 %v282, %v294
    %v305 = vadd.f32 %v205, %v295
    %v306 = vadd.f32 %v206, %v296
    %v307 = vadd.f32 %v207, %v297
    %v308 = vadd.f32 %v208, %v298
    %v309 = vadd.f32 %v209, %v299
    %v310 = vadd.f32 %v210, %v300
    %v311 = vadd.f32 %v211, %v301
    %v312 = vadd.f32 %v212, %v302
    %v313 = vadd.f32 %v213, %v303
    %v314 = vadd.f32 %v214, %v304
    %v315 = vmul.f32 %v305, %v24
    %v316 = vmul.f32 %v306, %v25
    %v317 = vmul.f32 %v307, %v26
    %v318 = vmul.f32 %v308, %v27
    %v319 = vmul.f32 %v309, %v28
    %v320 = vmul.f32 %v310, %v29
    %v321 = vmul.f32 %v311, %v30
    %v322 = vmul.f32 %v312, %v31
    %v323 = vmul.f32 %v313, %v32
    %v324 = vmul.f32 %v314, %v33
    %s325 = sld [smem:[#allocation2 + $0xb]]
    %v326 = vstv %s325
    %v327 = vmul.f32 %v326, %v35
    %v328 = vmul.f32 %v326, %v36
    %v329 = vmul.f32 %v326, %v37
    %v330 = vmul.f32 %v326, %v38
    %v331 = vmul.f32 %v326, %v39
    %v332 = vmul.f32 %v326, %v40
    %v333 = vmul.f32 %v326, %v41
    %v334 = vmul.f32 %v326, %v42
    %v335 = vmul.f32 %v326, %v43
    %v336 = vmul.f32 %v326, %v44
    %s337 = sld [smem:[#allocation2 + $0xa]]
    %v338 = vstv %s337
    %v339 = vadd.f32 %v327, %v338
    %v340 = vadd.f32 %v328, %v338
    %v341 = vadd.f32 %v329, %v338
    %v342 = vadd.f32 %v330, %v338
    %v343 = vadd.f32 %v331, %v338
    %v344 = vadd.f32 %v332, %v338
    %v345 = vadd.f32 %v333, %v338
    %v346 = vadd.f32 %v334, %v338
    %v347 = vadd.f32 %v335, %v338
    %v348 = vadd.f32 %v336, %v338
    %s349 = sld [smem:[#allocation2 + $0xc]]
    %v350 = vstv %s349
    %v351 = vmul.f32 %v350, %v65
    %v352 = vmul.f32 %v350, %v66
    %v353 = vmul.f32 %v350, %v67
    %v354 = vmul.f32 %v350, %v68
    %v355 = vmul.f32 %v350, %v69
    %v356 = vmul.f32 %v350, %v70
    %v357 = vmul.f32 %v350, %v71
    %v358 = vmul.f32 %v350, %v72
    %v359 = vmul.f32 %v350, %v73
    %v360 = vmul.f32 %v350, %v74
    %v361 = vadd.f32 %v339, %v351
    %v362 = vadd.f32 %v340, %v352
    %v363 = vadd.f32 %v341, %v353
    %v364 = vadd.f32 %v342, %v354
    %v365 = vadd.f32 %v343, %v355
    %v366 = vadd.f32 %v344, %v356
    %v367 = vadd.f32 %v345, %v357
    %v368 = vadd.f32 %v346, %v358
    %v369 = vadd.f32 %v347, %v359
    %v370 = vadd.f32 %v348, %v360
    %s371 = sld [smem:[#allocation2 + $0xd]]
    %v372 = vstv %s371
    %v373 = vmul.f32 %v372, %v85
    %v374 = vmul.f32 %v372, %v86
    %v375 = vmul.f32 %v372, %v87
    %v376 = vmul.f32 %v372, %v88
    %v377 = vmul.f32 %v372, %v89
    %v378 = vmul.f32 %v372, %v90
    %v379 = vmul.f32 %v372, %v91
    %v380 = vmul.f32 %v372, %v92
    %v381 = vmul.f32 %v372, %v93
    %v382 = vmul.f32 %v372, %v94
    %v383 = vadd.f32 %v361, %v373
    %v384 = vadd.f32 %v362, %v374
    %v385 = vadd.f32 %v363, %v375
    %v386 = vadd.f32 %v364, %v376
    %v387 = vadd.f32 %v365, %v377
    %v388 = vadd.f32 %v366, %v378
    %v389 = vadd.f32 %v367, %v379
    %v390 = vadd.f32 %v368, %v380
    %v391 = vadd.f32 %v369, %v381
    %v392 = vadd.f32 %v370, %v382
    %s393 = sld [smem:[#allocation2 + $0xe]]
    %v394 = vstv %s393
    %v395 = vmul.f32 %v394, %v105
    %v396 = vmul.f32 %v394, %v106
    %v397 = vmul.f32 %v394, %v107
    %v398 = vmul.f32 %v394, %v108
    %v399 = vmul.f32 %v394, %v109
    %v400 = vmul.f32 %v394, %v110
    %v401 = vmul.f32 %v394, %v111
    %v402 = vmul.f32 %v394, %v112
    %v403 = vmul.f32 %v394, %v113
    %v404 = vmul.f32 %v394, %v114
    %v405 = vadd.f32 %v383, %v395
    %v406 = vadd.f32 %v384, %v396
    %v407 = vadd.f32 %v385, %v397
    %v408 = vadd.f32 %v386, %v398
    %v409 = vadd.f32 %v387, %v399
    %v410 = vadd.f32 %v388, %v400
    %v411 = vadd.f32 %v389, %v401
    %v412 = vadd.f32 %v390, %v402
    %v413 = vadd.f32 %v391, %v403
    %v414 = vadd.f32 %v392, %v404
    %v415 = vadd.f32 %v315, %v405
    %v416 = vadd.f32 %v316, %v406
    %v417 = vadd.f32 %v317, %v407
    %v418 = vadd.f32 %v318, %v408
    %v419 = vadd.f32 %v319, %v409
    %v420 = vadd.f32 %v320, %v410
    %v421 = vadd.f32 %v321, %v411
    %v422 = vadd.f32 %v322, %v412
    %v423 = vadd.f32 %v323, %v413
    %v424 = vadd.f32 %v324, %v414
    %v425 = vmul.f32 %v415, %v24
    %v426 = vmul.f32 %v416, %v25
    %v427 = vmul.f32 %v417, %v26
    %v428 = vmul.f32 %v418, %v27
    %v429 = vmul.f32 %v419, %v28
    %v430 = vmul.f32 %v420, %v29
    %v431 = vmul.f32 %v421, %v30
    %v432 = vmul.f32 %v422, %v31
    %v433 = vmul.f32 %v423, %v32
    %v434 = vmul.f32 %v424, %v33
    %s435 = sld [smem:[#allocation2 + $0x6]]
    %v436 = vstv %s435
    %v437 = vmul.f32 %v436, %v35
    %v438 = vmul.f32 %v436, %v36
    %v439 = vmul.f32 %v436, %v37
    %v440 = vmul.f32 %v436, %v38
    %v441 = vmul.f32 %v436, %v39
    %v442 = vmul.f32 %v436, %v40
    %v443 = vmul.f32 %v436, %v41
    %v444 = vmul.f32 %v436, %v42
    %v445 = vmul.f32 %v436, %v43
    %v446 = vmul.f32 %v436, %v44
    %s447 = sld [smem:[#allocation2 + $0x5]]
    %v448 = vstv %s447
    %v449 = vadd.f32 %v437, %v448
    %v450 = vadd.f32 %v438, %v448
    %v451 = vadd.f32 %v439, %v448
    %v452 = vadd.f32 %v440, %v448
    %v453 = vadd.f32 %v441, %v448
    %v454 = vadd.f32 %v442, %v448
    %v455 = vadd.f32 %v443, %v448
    %v456 = vadd.f32 %v444, %v448
    %v457 = vadd.f32 %v445, %v448
    %v458 = vadd.f32 %v446, %v448
    %s459 = sld [smem:[#allocation2 + $0x7]]
    %v460 = vstv %s459
    %v461 = vmul.f32 %v460, %v65
    %v462 = vmul.f32 %v460, %v66
    %v463 = vmul.f32 %v460, %v67
    %v464 = vmul.f32 %v460, %v68
    %v465 = vmul.f32 %v460, %v69
    %v466 = vmul.f32 %v460, %v70
    %v467 = vmul.f32 %v460, %v71
    %v468 = vmul.f32 %v460, %v72
    %v469 = vmul.f32 %v460, %v73
    %v470 = vmul.f32 %v460, %v74
    %v471 = vadd.f32 %v449, %v461
    %v472 = vadd.f32 %v450, %v462
    %v473 = vadd.f32 %v451, %v463
    %v474 = vadd.f32 %v452, %v464
    %v475 = vadd.f32 %v453, %v465
    %v476 = vadd.f32 %v454, %v466
    %v477 = vadd.f32 %v455, %v467
    %v478 = vadd.f32 %v456, %v468
    %v479 = vadd.f32 %v457, %v469
    %v480 = vadd.f32 %v458, %v470
    %s481 = sld [smem:[#allocation2 + $0x8]]
    %v482 = vstv %s481
    %v483 = vmul.f32 %v482, %v85
    %v484 = vmul.f32 %v482, %v86
    %v485 = vmul.f32 %v482, %v87
    %v486 = vmul.f32 %v482, %v88
    %v487 = vmul.f32 %v482, %v89
    %v488 = vmul.f32 %v482, %v90
    %v489 = vmul.f32 %v482, %v91
    %v490 = vmul.f32 %v482, %v92
    %v491 = vmul.f32 %v482, %v93
    %v492 = vmul.f32 %v482, %v94
    %v493 = vadd.f32 %v471, %v483
    %v494 = vadd.f32 %v472, %v484
    %v495 = vadd.f32 %v473, %v485
    %v496 = vadd.f32 %v474, %v486
    %v497 = vadd.f32 %v475, %v487
    %v498 = vadd.f32 %v476, %v488
    %v499 = vadd.f32 %v477, %v489
    %v500 = vadd.f32 %v478, %v490
    %v501 = vadd.f32 %v479, %v491
    %v502 = vadd.f32 %v480, %v492
    %s503 = sld [smem:[#allocation2 + $0x9]]
    %v504 = vstv %s503
    %v505 = vmul.f32 %v504, %v105
    %v506 = vmul.f32 %v504, %v106
    %v507 = vmul.f32 %v504, %v107
    %v508 = vmul.f32 %v504, %v108
    %v509 = vmul.f32 %v504, %v109
    %v510 = vmul.f32 %v504, %v110
    %v511 = vmul.f32 %v504, %v111
    %v512 = vmul.f32 %v504, %v112
    %v513 = vmul.f32 %v504, %v113
    %v514 = vmul.f32 %v504, %v114
    %v515 = vadd.f32 %v493, %v505
    %v516 = vadd.f32 %v494, %v506
    %v517 = vadd.f32 %v495, %v507
    %v518 = vadd.f32 %v496, %v508
    %v519 = vadd.f32 %v497, %v509
    %v520 = vadd.f32 %v498, %v510
    %v521 = vadd.f32 %v499, %v511
    %v522 = vadd.f32 %v500, %v512
    %v523 = vadd.f32 %v501, %v513
    %v524 = vadd.f32 %v502, %v514
    %v525 = vadd.f32 %v425, %v515
    %v526 = vadd.f32 %v426, %v516
    %v527 = vadd.f32 %v427, %v517
    %v528 = vadd.f32 %v428, %v518
    %v529 = vadd.f32 %v429, %v519
    %v530 = vadd.f32 %v430, %v520
    %v531 = vadd.f32 %v431, %v521
    %v532 = vadd.f32 %v432, %v522
    %v533 = vadd.f32 %v433, %v523
    %v534 = vadd.f32 %v434, %v524
    %v535 = vmul.f32 %v525, %v24
    %v536 = vmul.f32 %v526, %v25
    %v537 = vmul.f32 %v527, %v26
    %v538 = vmul.f32 %v528, %v27
    %v539 = vmul.f32 %v529, %v28
    %v540 = vmul.f32 %v530, %v29
    %v541 = vmul.f32 %v531, %v30
    %v542 = vmul.f32 %v532, %v31
    %v543 = vmul.f32 %v533, %v32
    %v544 = vmul.f32 %v534, %v33
    %s545 = sld [smem:[#allocation2 + $0x1]]
    %v546 = vstv %s545
    %v547 = vmul.f32 %v546, %v35
    %v548 = vmul.f32 %v546, %v36
    %v549 = vmul.f32 %v546, %v37
    %v550 = vmul.f32 %v546, %v38
    %v551 = vmul.f32 %v546, %v39
    %v552 = vmul.f32 %v546, %v40
    %v553 = vmul.f32 %v546, %v41
    %v554 = vmul.f32 %v546, %v42
    %v555 = vmul.f32 %v546, %v43
    %v556 = vmul.f32 %v546, %v44
    %s557 = sld [smem:[#allocation2]]
    %v558 = vstv %s557
    %v559 = vadd.f32 %v547, %v558
    %v560 = vadd.f32 %v548, %v558
    %v561 = vadd.f32 %v549, %v558
    %v562 = vadd.f32 %v550, %v558
    %v563 = vadd.f32 %v551, %v558
    %v564 = vadd.f32 %v552, %v558
    %v565 = vadd.f32 %v553, %v558
    %v566 = vadd.f32 %v554, %v558
    %v567 = vadd.f32 %v555, %v558
    %v568 = vadd.f32 %v556, %v558
    %s569 = sld [smem:[#allocation2 + $0x2]]
    %v570 = vstv %s569
    %v571 = vmul.f32 %v570, %v65
    %v572 = vmul.f32 %v570, %v66
    %v573 = vmul.f32 %v570, %v67
    %v574 = vmul.f32 %v570, %v68
    %v575 = vmul.f32 %v570, %v69
    %v576 = vmul.f32 %v570, %v70
    %v577 = vmul.f32 %v570, %v71
    %v578 = vmul.f32 %v570, %v72
    %v579 = vmul.f32 %v570, %v73
    %v580 = vmul.f32 %v570, %v74
    %v581 = vadd.f32 %v559, %v571
    %v582 = vadd.f32 %v560, %v572
    %v583 = vadd.f32 %v561, %v573
    %v584 = vadd.f32 %v562, %v574
    %v585 = vadd.f32 %v563, %v575
    %v586 = vadd.f32 %v564, %v576
    %v587 = vadd.f32 %v565, %v577
    %v588 = vadd.f32 %v566, %v578
    %v589 = vadd.f32 %v567, %v579
    %v590 = vadd.f32 %v568, %v580
    %s591 = sld [smem:[#allocation2 + $0x3]]
    %v592 = vstv %s591
    %v593 = vmul.f32 %v592, %v85
    %v594 = vmul.f32 %v592, %v86
    %v595 = vmul.f32 %v592, %v87
    %v596 = vmul.f32 %v592, %v88
    %v597 = vmul.f32 %v592, %v89
    %v598 = vmul.f32 %v592, %v90
    %v599 = vmul.f32 %v592, %v91
    %v600 = vmul.f32 %v592, %v92
    %v601 = vmul.f32 %v592, %v93
    %v602 = vmul.f32 %v592, %v94
    %v603 = vadd.f32 %v581, %v593
    %v604 = vadd.f32 %v582, %v594
    %v605 = vadd.f32 %v583, %v595
    %v606 = vadd.f32 %v584, %v596
    %v607 = vadd.f32 %v585, %v597
    %v608 = vadd.f32 %v586, %v598
    %v609 = vadd.f32 %v587, %v599
    %v610 = vadd.f32 %v588, %v600
    %v611 = vadd.f32 %v589, %v601
    %v612 = vadd.f32 %v590, %v602
    %s613 = sld [smem:[#allocation2 + $0x4]]
    %v614 = vstv %s613
    %v615 = vmul.f32 %v614, %v105
    %v616 = vmul.f32 %v614, %v106
    %v617 = vmul.f32 %v614, %v107
    %v618 = vmul.f32 %v614, %v108
    %v619 = vmul.f32 %v614, %v109
    %v620 = vmul.f32 %v614, %v110
    %v621 = vmul.f32 %v614, %v111
    %v622 = vmul.f32 %v614, %v112
    %v623 = vmul.f32 %v614, %v113
    %v624 = vmul.f32 %v614, %v114
    %v625 = vadd.f32 %v603, %v615
    %v626 = vadd.f32 %v604, %v616
    %v627 = vadd.f32 %v605, %v617
    %v628 = vadd.f32 %v606, %v618
    %v629 = vadd.f32 %v607, %v619
    %v630 = vadd.f32 %v608, %v620
    %v631 = vadd.f32 %v609, %v621
    %v632 = vadd.f32 %v610, %v622
    %v633 = vadd.f32 %v611, %v623
    %v634 = vadd.f32 %v612, %v624
    %v635 = vadd.f32 %v535, %v625
    %v636 = vadd.f32 %v536, %v626
    %v637 = vadd.f32 %v537, %v627
    %v638 = vadd.f32 %v538, %v628
    %v639 = vadd.f32 %v539, %v629
    %v640 = vadd.f32 %v540, %v630
    %v641 = vadd.f32 %v541, %v631
    %v642 = vadd.f32 %v542, %v632
    %v643 = vadd.f32 %v543, %v633
    %v644 = vadd.f32 %v544, %v634
    %645 = vst [vmem:[%s2] sm:$0xff] %v635
    %646 = vst [vmem:[%s2 + $0x8] sm:$0xff] %v636
    %647 = vst [vmem:[%s2 + $0x10] sm:$0xff] %v637
    %648 = vst [vmem:[%s2 + $0x18] sm:$0xff] %v638
    %649 = vst [vmem:[%s2 + $0x20] sm:$0xff] %v639
    %650 = vst [vmem:[%s2 + $0x28] sm:$0xff] %v640
    %651 = vst [vmem:[%s2 + $0x30] sm:$0xff] %v641
    %652 = vst [vmem:[%s2 + $0x38] sm:$0xff] %v642
    %653 = vst [vmem:[%s2 + $0x40] sm:$0xff] %v643
    %654 = vst [vmem:[%s2 + $0x48] sm:$0xff] %v644
    // Predicated region
    $region14: #{chnn_forward.1} parent=1 // pred_check
      _
    $region15: #{chnn_forward.1} parent=1 // pred_check_branch
      %656 = sbr.rel (0) target = $region17
    $region16: #{chnn_forward.1} parent=1 // pred_region
      _
    $region17: #{chnn_forward.1} parent=1 // pred_fallthru
      _
    // Predicated region
    $region18: #{chnn_forward.1} parent=1 // pred_check
      _
    $region19: #{chnn_forward.1} parent=1 // pred_check_branch
      %658 = sbr.rel (0) target = $region21
    $region20: #{chnn_forward.1} parent=1 // pred_region
      _
    $region21: #{chnn_forward.1} parent=1 // pred_fallthru
      _
    %659 = vsyncpa [#allocation3], 1

</llo_original>
